<compile_context>
chip_gen: v5e
topology: v5e:2x2
jax: 0.10.0
libtpu: 0.0.40
codegen_flags: <defaults>
</compile_context>

<pallas_src>
import functools

import jax
import jax.numpy as jnp
from jax import lax
from jax.experimental import pallas as pl
from jax.experimental.pallas import tpu as pltpu


def _round_up(a: int, b: int) -> int:
    return ((a + b - 1) // b) * b


def _ffn_kernel(x_ref, w1_ref, b1_ref, w2_ref, b2_ref, o_ref, acc_ref, *,
                hc, n_hc, matmul_dtype):
    # x_ref: (BR, Mp); w1_ref: (Mp, Hd_p); b1_ref: (1, Hd_p) f32;
    # w2_ref: (Hd_p, Mp); b2_ref: (1, Mp) f32; o_ref: (BR, Mp);
    # acc_ref: (BR, Mp) f32 scratch.
    x = x_ref[...].astype(matmul_dtype)          # per-tile cast (no HBM cost)
    acc_ref[...] = jnp.zeros_like(acc_ref)

    def body(c, carry):
        off = pl.multiple_of(c * hc, hc)
        w1c = w1_ref[:, pl.ds(off, hc)]          # (Mp, HC) resident weights
        b1c = b1_ref[:, pl.ds(off, hc)]          # (1, HC) f32
        # MXU matmul with f32 accumulation; bias + ReLU in f32 on the VPU.
        h = jnp.dot(x, w1c, preferred_element_type=jnp.float32) + b1c
        h = jnp.maximum(h, 0.0)
        w2c = w2_ref[pl.ds(off, hc), :]          # (HC, Mp)
        acc_ref[...] += jnp.dot(h.astype(matmul_dtype), w2c,
                                preferred_element_type=jnp.float32)
        return carry

    lax.fori_loop(0, n_hc, body, 0, unroll=True)

    o_ref[...] = (acc_ref[...] + b2_ref[...]).astype(o_ref.dtype)


def _resident_spec(shape):
    """Constant index_map => fetched once, resident across the grid.
    Single-buffer it: nothing is ever re-fetched, so a second buffer is pure
    VMEM waste (important on v7x's 64 MiB)."""
    try:
        return pl.BlockSpec(shape, lambda i: (0, 0), pipeline_mode=pl.Buffered(1))
    except Exception:  # older jax without pipeline_mode / Buffered
        return pl.BlockSpec(shape, lambda i: (0, 0))


def feed_forward_block(x, params, *, block_rows=512, hidden_chunk=512,
                       matmul_dtype=jnp.float32):
    """x: (N, K, M).  params = (w1, b1, w2, b2) with
    w1: (M, Hd), b1: (1, Hd), w2: (Hd, M), b2: (1, M)  (weights pre-transposed
    for x @ W, i.e. torch's linear.weight.T).
    matmul_dtype: dtype of the MXU operands (use jnp.bfloat16 on v6e/v7x)."""
    w1, b1, w2, b2 = params
    N, K, M = x.shape
    Hd = w1.shape[1]
    assert w1.shape == (M, Hd) and w2.shape == (Hd, M)

    # ---- lane-dense padding: embed & hidden dims to multiples of 128 --------
    Mp = _round_up(M, 128)
    Hd_p = _round_up(Hd, 128)
    HC = min(hidden_chunk, Hd_p)                 # in-kernel hidden chunk
    Hd_p = _round_up(Hd_p, HC)
    n_hc = Hd_p // HC

    # Zero padding is exact: padded w1 columns give h == relu(0 + 0) == 0,
    # padded w2 rows multiply those zeros, padded x/w1 lanes contribute 0, and
    # padded output lanes are sliced off below.
    w1p = jnp.zeros((Mp, Hd_p), matmul_dtype).at[:M, :Hd].set(w1.astype(matmul_dtype))
    w2p = jnp.zeros((Hd_p, Mp), matmul_dtype).at[:Hd, :M].set(w2.astype(matmul_dtype))
    b1p = jnp.zeros((1, Hd_p), jnp.float32).at[:, :Hd].set(b1.astype(jnp.float32))
    b2p = jnp.zeros((1, Mp), jnp.float32).at[:, :M].set(b2.astype(jnp.float32))

    R = N * K
    x2 = x.reshape(R, M)
    if Mp != M:
        x2 = jnp.pad(x2, ((0, 0), (0, Mp - M)))  # lane pad only; rows untouched

    # ---- row blocking: 128-aligned, >= 2 grid steps when R is large ---------
    if R >= 256:
        n_blocks = max(2, pl.cdiv(R, block_rows))   # >=2 blocks shards v7x's 2 TCs
        BR = _round_up(pl.cdiv(R, n_blocks), 128)   # MXU-row aligned block
    else:
        BR = R                                      # full-extent block (always legal)
    grid = (pl.cdiv(R, BR),)                        # last block may be partial

    # ---- explicit VMEM budget ------------------------------------------------
    w_isz = jnp.dtype(matmul_dtype).itemsize
    x_isz = jnp.dtype(x.dtype).itemsize
    needed = (2 * BR * Mp * x_isz                 # x tiles (double-buffered)
              + 2 * BR * Mp * x_isz               # out tiles (double-buffered)
              + (Mp * Hd_p + Hd_p * Mp) * w_isz   # resident weights (single buffer)
              + 2 * (Hd_p + Mp) * 4               # resident biases (f32)
              + BR * Mp * 4                       # f32 accumulator scratch
              + 2 * BR * HC * 4)                  # live hidden chunk + slack
    try:
        phys = pltpu.get_tpu_info().vmem_capacity_bytes
    except Exception:
        phys = 64 * 1024 * 1024                   # conservative: v7x per-core VMEM
    vmem_limit = int(min(max(needed + (8 << 20), 32 << 20), int(phys * 0.85)))

    kernel = functools.partial(_ffn_kernel, hc=HC, n_hc=n_hc,
                               matmul_dtype=matmul_dtype)

    out = pl.pallas_call(
        kernel,
        out_shape=jax.ShapeDtypeStruct((R, Mp), x.dtype),
        grid_spec=pltpu.PrefetchScalarGridSpec(
            num_scalar_prefetch=0,
            grid=grid,
            in_specs=[
                # Activations: row-tiled, default double-buffered pipeline.
                # (If DMA-exposed at large M / small Hd, raise to pl.Buffered(3).)
                pl.BlockSpec((BR, Mp), lambda i: (i, 0)),
                _resident_spec((Mp, Hd_p)),       # w1
                _resident_spec((1, Hd_p)),        # b1
                _resident_spec((Hd_p, Mp)),       # w2
                _resident_spec((1, Mp)),          # b2
            ],
            out_specs=pl.BlockSpec((BR, Mp), lambda i: (i, 0)),
            scratch_shapes=[pltpu.VMEM((BR, Mp), jnp.float32)],
        ),
        compiler_params=pltpu.CompilerParams(
            dimension_semantics=("parallel",),
            vmem_limit_bytes=vmem_limit,
        ),
    )(x2, w1p, b1p, w2p, b2p)

    if Mp != M:
        out = out[:, :M]
    return out.reshape(N, K, M)


def init_params(key, inp_dim, hidden_dim):
    """Deterministic init mirroring the torch module: weights use the module's
    (asymmetric) uniform bounds -(0.5**(6/(in+out))) .. 0.5**(6/(out+out));
    biases use nn.Linear's default U(-1/sqrt(fan_in), 1/sqrt(fan_in)).
    Weights are stored pre-transposed for x @ W."""
    ks = jax.random.split(key, 4)

    def u(k, shape, lo, hi):
        return jax.random.uniform(k, shape, jnp.float32, lo, hi)

    lo1 = -(0.5 ** (6.0 / (inp_dim + hidden_dim)))
    hi1 = 0.5 ** (6.0 / (hidden_dim + hidden_dim))
    lo2 = -(0.5 ** (6.0 / (hidden_dim + inp_dim)))
    hi2 = 0.5 ** (6.0 / (inp_dim + inp_dim))

    w1 = u(ks[0], (inp_dim, hidden_dim), lo1, hi1)                # (M, Hd) == torch W1.T
    b1 = u(ks[1], (1, hidden_dim), -1.0 / inp_dim ** 0.5, 1.0 / inp_dim ** 0.5)
    w2 = u(ks[2], (hidden_dim, inp_dim), lo2, hi2)                # (Hd, M) == torch W2.T
    b2 = u(ks[3], (1, inp_dim), -1.0 / hidden_dim ** 0.5, 1.0 / hidden_dim ** 0.5)
    return (w1, b1, w2, b2)


def reference_ffn(x, params):
    """Pure-JAX reference: linear - relu - linear."""
    w1, b1, w2, b2 = params
    h = jnp.maximum(x @ w1 + b1[0], 0.0)
    return h @ w2 + b2[0]


if __name__ == "__main__":
    N, K, M = 2, 8, 32          # batch, seq_len, embedding dim
    hidden_dim = 64             # hidden_dim_feedforward

    root = jax.random.PRNGKey(0)
    k_x, k_par = jax.random.split(root)
    x = jax.random.normal(k_x, (N, K, M), jnp.float32)
    params = init_params(k_par, M, hidden_dim)

    y_ref = reference_ffn(x, params)

    # Exact f32 path (validation build).
    y = jax.block_until_ready(feed_forward_block(x, params))
    assert y.shape == (N, K, M)
    assert jnp.allclose(y, y_ref, atol=1e-5, rtol=1e-5), "f32 mismatch vs reference"

    # bf16 matmul-operand path (production configuration on v6e/v7x); looser
    # tolerance since the MXU operands are rounded to bf16.
    y_bf16 = jax.block_until_ready(
        feed_forward_block(x, params, matmul_dtype=jnp.bfloat16))
    assert y_bf16.shape == (N, K, M)
    assert bool(jnp.all(jnp.isfinite(y_bf16)))
    assert jnp.allclose(y_bf16, y_ref, atol=5e-1, rtol=1e-1), "bf16 mismatch vs reference"

    print("KERNEL_OK")
</pallas_src>

<mosaic_0001>
module attributes {stable_mosaic.version = 11 : i64} {
  func.func @_ffn_kernel(%arg0: i32, %arg1: memref<16x128xf32, #tpu.memory_space<vmem>>, %arg2: memref<128x128xf32, #tpu.memory_space<vmem>>, %arg3: memref<1x128xf32, #tpu.memory_space<vmem>>, %arg4: memref<128x128xf32, #tpu.memory_space<vmem>>, %arg5: memref<1x128xf32, #tpu.memory_space<vmem>>, %arg6: memref<16x128xf32, #tpu.memory_space<vmem>>, %arg7: memref<16x128xf32, #tpu.memory_space<vmem>>) attributes {dimension_semantics = [#tpu.dimension_semantics<parallel>], iteration_bounds = array<i64: 1>, scalar_prefetch = 0 : i64, scratch_operands = 1 : i64, tpu.core_type = #tpu.core_type<tc>, window_params = [{transform_indices = @transform_0, window_bounds = array<i64: 16, 128>}, {pipeline_mode = #tpu.pipeline_mode<synchronous>, transform_indices = @transform_1, window_bounds = array<i64: 128, 128>}, {pipeline_mode = #tpu.pipeline_mode<synchronous>, transform_indices = @transform_2, window_bounds = array<i64: 1, 128>}, {pipeline_mode = #tpu.pipeline_mode<synchronous>, transform_indices = @transform_3, window_bounds = array<i64: 128, 128>}, {pipeline_mode = #tpu.pipeline_mode<synchronous>, transform_indices = @transform_4, window_bounds = array<i64: 1, 128>}, {transform_indices = @transform_5, window_bounds = array<i64: 16, 128>}]} {
    %c0 = arith.constant 0 : index
    %c0_0 = arith.constant 0 : index
    %0 = vector.load %arg1[%c0, %c0_0] : memref<16x128xf32, #tpu.memory_space<vmem>>, vector<16x128xf32>
    %cst = arith.constant 0.000000e+00 : f32
    %1 = vector.broadcast %cst : f32 to vector<16x128xf32>
    %c0_1 = arith.constant 0 : index
    %c0_2 = arith.constant 0 : index
    %2 = vector.load %arg7[%c0_1, %c0_2] : memref<16x128xf32, #tpu.memory_space<vmem>>, vector<16x128xf32>
    tpu.vector_store %arg7[%c0_1, %c0_2], %1 {strides = array<i32>} : memref<16x128xf32, #tpu.memory_space<vmem>>, vector<16x128xf32>,
    %c0_i32 = arith.constant 0 : i32
    %c128_i32 = arith.constant 128 : i32
    %3 = arith.muli %c0_i32, %c128_i32 : i32
    %4 = tpu.assume_multiple %3, 128 : i32
    %c0_3 = arith.constant 0 : index
    %5 = arith.index_cast %4 : i32 to index
    %6 = vector.load %arg2[%c0_3, %5] : memref<128x128xf32, #tpu.memory_space<vmem>>, vector<128x128xf32>
    %c0_4 = arith.constant 0 : index
    %7 = arith.index_cast %4 : i32 to index
    %8 = vector.load %arg3[%c0_4, %7] : memref<1x128xf32, #tpu.memory_space<vmem>>, vector<1x128xf32>
    %cst_5 = arith.constant dense<0.000000e+00> : vector<16x128xf32>
    %9 = tpu.matmul %0, %6, %cst_5 {dimension_numbers = #tpu.dot_dimension_numbers<[1], [0], [0], [1], [0, 0, 1, 1], [], []>} : vector<16x128xf32>, vector<128x128xf32>, vector<16x128xf32> -> vector<16x128xf32>
    %10 = vector.broadcast %8 : vector<1x128xf32> to vector<16x128xf32>
    %11 = arith.addf %9, %10 : vector<16x128xf32>
    %cst_6 = arith.constant 0.000000e+00 : f32
    %12 = vector.broadcast %cst_6 : f32 to vector<16x128xf32>
    %13 = arith.maximumf %11, %12 : vector<16x128xf32>
    %14 = arith.index_cast %4 : i32 to index
    %c0_7 = arith.constant 0 : index
    %15 = vector.load %arg4[%14, %c0_7] : memref<128x128xf32, #tpu.memory_space<vmem>>, vector<128x128xf32>
    %c0_8 = arith.constant 0 : index
    %c0_9 = arith.constant 0 : index
    %16 = vector.load %arg7[%c0_8, %c0_9] : memref<16x128xf32, #tpu.memory_space<vmem>>, vector<16x128xf32>
    %cst_10 = arith.constant dense<0.000000e+00> : vector<16x128xf32>
    %17 = tpu.matmul %13, %15, %cst_10 {dimension_numbers = #tpu.dot_dimension_numbers<[1], [0], [0], [1], [0, 0, 1, 1], [], []>} : vector<16x128xf32>, vector<128x128xf32>, vector<16x128xf32> -> vector<16x128xf32>
    %18 = arith.addf %16, %17 : vector<16x128xf32>
    %c0_11 = arith.constant 0 : index
    %c0_12 = arith.constant 0 : index
    %19 = vector.load %arg7[%c0_11, %c0_12] : memref<16x128xf32, #tpu.memory_space<vmem>>, vector<16x128xf32>
    tpu.vector_store %arg7[%c0_11, %c0_12], %18 {strides = array<i32>} : memref<16x128xf32, #tpu.memory_space<vmem>>, vector<16x128xf32>,
    %c1_i32 = arith.constant 1 : i32
    %c0_13 = arith.constant 0 : index
    %c0_14 = arith.constant 0 : index
    %20 = vector.load %arg7[%c0_13, %c0_14] : memref<16x128xf32, #tpu.memory_space<vmem>>, vector<16x128xf32>
    %c0_15 = arith.constant 0 : index
    %c0_16 = arith.constant 0 : index
    %21 = vector.load %arg5[%c0_15, %c0_16] : memref<1x128xf32, #tpu.memory_space<vmem>>, vector<1x128xf32>
    %22 = vector.broadcast %21 : vector<1x128xf32> to vector<16x128xf32>
    %23 = arith.addf %20, %22 : vector<16x128xf32>
    %c0_17 = arith.constant 0 : index
    %c0_18 = arith.constant 0 : index
    %24 = vector.load %arg6[%c0_17, %c0_18] : memref<16x128xf32, #tpu.memory_space<vmem>>, vector<16x128xf32>
    tpu.vector_store %arg6[%c0_17, %c0_18], %23 {strides = array<i32>} : memref<16x128xf32, #tpu.memory_space<vmem>>, vector<16x128xf32>,
    return
  }
  func.func @transform_0(%arg0: i32) -> (i32, i32) {
    %c0_i32 = arith.constant 0 : i32
    %c0_i32_0 = arith.constant 0 : i32
    return %arg0, %c0_i32 : i32, i32
  }
  func.func @transform_1(%arg0: i32) -> (i32, i32) {
    %c0_i32 = arith.constant 0 : i32
    %c0_i32_0 = arith.constant 0 : i32
    %c0_i32_1 = arith.constant 0 : i32
    return %c0_i32, %c0_i32_0 : i32, i32
  }
  func.func @transform_2(%arg0: i32) -> (i32, i32) {
    %c0_i32 = arith.constant 0 : i32
    %c0_i32_0 = arith.constant 0 : i32
    %c0_i32_1 = arith.constant 0 : i32
    return %c0_i32, %c0_i32_0 : i32, i32
  }
  func.func @transform_3(%arg0: i32) -> (i32, i32) {
    %c0_i32 = arith.constant 0 : i32
    %c0_i32_0 = arith.constant 0 : i32
    %c0_i32_1 = arith.constant 0 : i32
    return %c0_i32, %c0_i32_0 : i32, i32
  }
  func.func @transform_4(%arg0: i32) -> (i32, i32) {
    %c0_i32 = arith.constant 0 : i32
    %c0_i32_0 = arith.constant 0 : i32
    %c0_i32_1 = arith.constant 0 : i32
    return %c0_i32, %c0_i32_0 : i32, i32
  }
  func.func @transform_5(%arg0: i32) -> (i32, i32) {
    %c0_i32 = arith.constant 0 : i32
    %c0_i32_0 = arith.constant 0 : i32
    return %arg0, %c0_i32 : i32, i32
  }
}

</mosaic_0001>

<llo_original>
// kernel: tpu_custom_call.1
$region0: #{tpu_custom_call.1}
  #allocation0 [shape = 'u32[]', space=smem, size = 0x4, offset = 0x4, fixed_abs, tag = 'smem constant byte address 0x4 - core index']
  #allocation1 [shape = 'u32[72,128]{1,0:T(1,128)}', space=vmem, size = 0x9000, scoped, tag = 'internal scratch']
  #allocation2 [shape = 'f32[16,128]{1,0:T(8,128)}', space=vmem, size = 0x2000, scoped, tag = 'scratch operand']
  %s0 = inlined_call_operand.hbm [shape: f32[16,128], index: 0, kind: input, shape index: {}]
  %s1 = inlined_call_operand.hbm [shape: f32[128,128], index: 1, kind: input, shape index: {}]
  %s2 = inlined_call_operand.vmem [shape: f32[1,128], index: 2, kind: input, shape index: {}]
  %s3 = inlined_call_operand.hbm [shape: f32[128,128], index: 3, kind: input, shape index: {}]
  %s4 = inlined_call_operand.vmem [shape: f32[1,128], index: 4, kind: input, shape index: {}]
  %s5 = inlined_call_operand.hbm [shape: f32[16,128], index: 5, kind: output, shape index: {}]
  %s6 = sld [smem:[#allocation0]]
  $region42: #{tpu_custom_call.1} parent=0
    _
  %s8 = ssub.s32 1, %s6
  %s9 = scalar_select 0, %s8, %s6
  $region1: #{tpu_custom_call.1} parent=0
    #allocation3 [shape = 'u8[8192]{0}', space=vmem, size = 0x2000, scoped, tag = 'input window, operand 0, single buffered']
    #allocation4 [shape = 's32[1]{0}', space=sflag, size = 0x4, scoped, tag = 'scoped memory for tpu_custom_call.1']
    #allocation5 [shape = 's32[1]{0}', space=sflag, size = 0x4, scoped, tag = 'scoped memory for tpu_custom_call.1']
    #allocation6 [shape = 'u8[65536]{0}', space=vmem, size = 0x10000, scoped, tag = 'input window, operand 1, single buffered']
    #allocation7 [shape = 's32[1]{0}', space=sflag, size = 0x4, scoped, tag = 'scoped memory for tpu_custom_call.1']
    #allocation8 [shape = 'u8[65536]{0}', space=vmem, size = 0x10000, scoped, tag = 'input window, operand 3, single buffered']
    #allocation9 [shape = 'u8[8192]{0}', space=vmem, size = 0x2000, scoped, tag = 'output window, operand 0, single buffered']
    %10 = vsyncpa [#allocation4], 0
    %11 = vsyncpa [#allocation7], 0
    %12 = vsyncpa [#allocation5], 0
    // Predicated region
    $region2: #{tpu_custom_call.1} parent=1 // pred_check
      _
    $region3: #{tpu_custom_call.1} parent=1 // pred_check_branch
      %14 = sbr.rel (0) target = $region5
    $region4: #{tpu_custom_call.1} parent=1 // pred_region
      %16 = vsyncadd [#allocation4], 0
      %s17 = sshll.u32 %s0, 4
      %s18 = int_to_ptr.hbm [resolvable:$true] %s17
      %s19 = sshll.u32 [#allocation3], 4
      %s20 = int_to_ptr.vmem [resolvable:$true] %s19
      %25 = dma.hbm_to_vmem [thread:$0]  %s18, 256, %s20, [#allocation4], 128, 128, 8
    $region5: #{tpu_custom_call.1} parent=1 // pred_fallthru
      _
    // Predicated region
    $region6: #{tpu_custom_call.1} parent=1 // pred_check
      _
    $region7: #{tpu_custom_call.1} parent=1 // pred_check_branch
      %27 = sbr.rel (0) target = $region9
    $region8: #{tpu_custom_call.1} parent=1 // pred_region
      %29 = vsyncadd [#allocation7], 0
      %s30 = sshll.u32 %s1, 4
      %s31 = int_to_ptr.hbm [resolvable:$true] %s30
      %s32 = sshll.u32 [#allocation6], 4
      %s33 = int_to_ptr.vmem [resolvable:$true] %s32
      %38 = dma.hbm_to_vmem [thread:$0]  %s31, 2048, %s33, [#allocation7], 128, 128, 8
    $region9: #{tpu_custom_call.1} parent=1 // pred_fallthru
      _
    // Predicated region
    $region10: #{tpu_custom_call.1} parent=1 // pred_check
      _
    $region11: #{tpu_custom_call.1} parent=1 // pred_check_branch
      %40 = sbr.rel (0) target = $region13
    $region12: #{tpu_custom_call.1} parent=1 // pred_region
      _
    $region13: #{tpu_custom_call.1} parent=1 // pred_fallthru
      _
    // Predicated region
    $region14: #{tpu_custom_call.1} parent=1 // pred_check
      _
    $region15: #{tpu_custom_call.1} parent=1 // pred_check_branch
      %42 = sbr.rel (0) target = $region17
    $region16: #{tpu_custom_call.1} parent=1 // pred_region
      %44 = vsyncadd [#allocation7], 0
      %s45 = sshll.u32 %s3, 4
      %s46 = int_to_ptr.hbm [resolvable:$true] %s45
      %s47 = sshll.u32 [#allocation8], 4
      %s48 = int_to_ptr.vmem [resolvable:$true] %s47
      %53 = dma.hbm_to_vmem [thread:$0]  %s46, 2048, %s48, [#allocation7], 128, 128, 8
    $region17: #{tpu_custom_call.1} parent=1 // pred_fallthru
      _
    // Predicated region
    $region18: #{tpu_custom_call.1} parent=1 // pred_check
      _
    $region19: #{tpu_custom_call.1} parent=1 // pred_check_branch
      %55 = sbr.rel (0) target = $region21
    $region20: #{tpu_custom_call.1} parent=1 // pred_region
      _
    $region21: #{tpu_custom_call.1} parent=1 // pred_fallthru
      _
    // Predicated region
    $region22: #{tpu_custom_call.1} parent=1 // pred_check
      _
    $region23: #{tpu_custom_call.1} parent=1 // pred_check_branch
      %57 = sbr.rel (0) target = $region25
    $region24: #{tpu_custom_call.1} parent=1 // pred_region
      %59 = dma.done [#allocation4], 256
    $region25: #{tpu_custom_call.1} parent=1 // pred_fallthru
      _
    // Predicated region
    $region26: #{tpu_custom_call.1} parent=1 // pred_check
      _
    $region27: #{tpu_custom_call.1} parent=1 // pred_check_branch
      %61 = sbr.rel (0) target = $region29
    $region28: #{tpu_custom_call.1} parent=1 // pred_region
      %63 = dma.done [#allocation7], 2048
    $region29: #{tpu_custom_call.1} parent=1 // pred_fallthru
      _
    // Predicated region
    $region30: #{tpu_custom_call.1} parent=1 // pred_check
      _
    $region31: #{tpu_custom_call.1} parent=1 // pred_check_branch
      %65 = sbr.rel (0) target = $region33
    $region32: #{tpu_custom_call.1} parent=1 // pred_region
      %67 = dma.done [#allocation7], 2048
    $region33: #{tpu_custom_call.1} parent=1 // pred_fallthru
      _
    %v68 = vld [vmem:[#allocation3] sm:$0xff]
    %v69 = vld [vmem:[#allocation3 + $0x8] sm:$0xff]
    %70 = vst [vmem:[#allocation2] sm:$0xff] 0.0
    %71 = vst [vmem:[#allocation2 + $0x8] sm:$0xff] 0.0
    %v72 = vld [vmem:[#allocation6] sm:$0xff]
    %v73 = vld [vmem:[#allocation6 + $0x8] sm:$0xff]
    %v74 = vld [vmem:[#allocation6 + $0x10] sm:$0xff]
    %v75 = vld [vmem:[#allocation6 + $0x18] sm:$0xff]
    %v76 = vld [vmem:[#allocation6 + $0x20] sm:$0xff]
    %v77 = vld [vmem:[#allocation6 + $0x28] sm:$0xff]
    %v78 = vld [vmem:[#allocation6 + $0x30] sm:$0xff]
    %v79 = vld [vmem:[#allocation6 + $0x38] sm:$0xff]
    %v80 = vld [vmem:[#allocation6 + $0x40] sm:$0xff]
    %v81 = vld [vmem:[#allocation6 + $0x48] sm:$0xff]
    %v82 = vld [vmem:[#allocation6 + $0x50] sm:$0xff]
    %v83 = vld [vmem:[#allocation6 + $0x58] sm:$0xff]
    %v84 = vld [vmem:[#allocation6 + $0x60] sm:$0xff]
    %v85 = vld [vmem:[#allocation6 + $0x68] sm:$0xff]
    %v86 = vld [vmem:[#allocation6 + $0x70] sm:$0xff]
    %v87 = vld [vmem:[#allocation6 + $0x78] sm:$0xff]
    %v88 = vld [vmem:[%s2] sm:$0x1]
    %v90 = vperm.slane %v88, 0
    %92 = vmatpush.msra.mxu0 %v87
    %93 = vmatpush.msra.mxu0 %v86
    %94 = vmatpush.msra.mxu0 %v85
    %95 = vmatpush.msra.mxu0 %v84
    %96 = vmatpush.msra.mxu0 %v83
    %97 = vmatpush.msra.mxu0 %v82
    %98 = vmatpush.msra.mxu0 %v81
    %99 = vmatpush.msra.mxu0 %v80
    %100 = vmatpush.msra.mxu0 %v79
    %101 = vmatpush.msra.mxu0 %v78
    %102 = vmatpush.msra.mxu0 %v77
    %103 = vmatpush.msra.mxu0 %v76
    %104 = vmatpush.msra.mxu0 %v75
    %105 = vmatpush.msra.mxu0 %v74
    %106 = vmatpush.msra.mxu0 %v73
    %107 = vmatpush.msra.mxu0 %v72
    %108 = vmatmul.f32.gmra.mxu0 %v68
    %v109 = vpop.f32.mrf.mxu0
    %v110 = vadd.f32 %v90, %v109
    %111 = vmatmul.f32.gmra.mxu0 %v69
    %v112 = vpop.f32.mrf.mxu0
    %v113 = vadd.f32 %v90, %v112
    %114 = vdwg.mxu0
    %v115 = vmax.f32 %v110, 0.0
    %v116 = vmax.f32 %v113, 0.0
    %v117 = vld [vmem:[#allocation8] sm:$0xff]
    %v118 = vld [vmem:[#allocation8 + $0x8] sm:$0xff]
    %v119 = vld [vmem:[#allocation8 + $0x10] sm:$0xff]
    %v120 = vld [vmem:[#allocation8 + $0x18] sm:$0xff]
    %v121 = vld [vmem:[#allocation8 + $0x20] sm:$0xff]
    %v122 = vld [vmem:[#allocation8 + $0x28] sm:$0xff]
    %v123 = vld [vmem:[#allocation8 + $0x30] sm:$0xff]
    %v124 = vld [vmem:[#allocation8 + $0x38] sm:$0xff]
    %v125 = vld [vmem:[#allocation8 + $0x40] sm:$0xff]
    %v126 = vld [vmem:[#allocation8 + $0x48] sm:$0xff]
    %v127 = vld [vmem:[#allocation8 + $0x50] sm:$0xff]
    %v128 = vld [vmem:[#allocation8 + $0x58] sm:$0xff]
    %v129 = vld [vmem:[#allocation8 + $0x60] sm:$0xff]
    %v130 = vld [vmem:[#allocation8 + $0x68] sm:$0xff]
    %v131 = vld [vmem:[#allocation8 + $0x70] sm:$0xff]
    %v132 = vld [vmem:[#allocation8 + $0x78] sm:$0xff]
    %v133 = vld [vmem:[#allocation2] sm:$0xff]
    %v134 = vld [vmem:[#allocation2 + $0x8] sm:$0xff]
    %135 = vmatpush.msra.mxu0 %v132
    %136 = vmatpush.msra.mxu0 %v131
    %137 = vmatpush.msra.mxu0 %v130
    %138 = vmatpush.msra.mxu0 %v129
    %139 = vmatpush.msra.mxu0 %v128
    %140 = vmatpush.msra.mxu0 %v127
    %141 = vmatpush.msra.mxu0 %v126
    %142 = vmatpush.msra.mxu0 %v125
    %143 = vmatpush.msra.mxu0 %v124
    %144 = vmatpush.msra.mxu0 %v123
    %145 = vmatpush.msra.mxu0 %v122
    %146 = vmatpush.msra.mxu0 %v121
    %147 = vmatpush.msra.mxu0 %v120
    %148 = vmatpush.msra.mxu0 %v119
    %149 = vmatpush.msra.mxu0 %v118
    %150 = vmatpush.msra.mxu0 %v117
    %151 = vmatmul.f32.gmra.mxu0 %v115
    %v152 = vpop.f32.mrf.mxu0
    %v153 = vadd.f32 0.0, %v152
    %154 = vmatmul.f32.gmra.mxu0 %v116
    %v155 = vpop.f32.mrf.mxu0
    %v156 = vadd.f32 0.0, %v155
    %157 = vdwg.mxu0
    %v158 = vadd.f32 %v133, %v153
    %v159 = vadd.f32 %v134, %v156
    %160 = vst [vmem:[#allocation2] sm:$0xff] %v158
    %161 = vst [vmem:[#allocation2 + $0x8] sm:$0xff] %v159
    %v162 = vld [vmem:[#allocation2] sm:$0xff]
    %v163 = vld [vmem:[#allocation2 + $0x8] sm:$0xff]
    %v164 = vld [vmem:[%s4] sm:$0x1]
    %v166 = vperm.slane %v164, 0
    %v168 = vadd.f32 %v162, %v166
    %v169 = vadd.f32 %v163, %v166
    %170 = vst [vmem:[#allocation9] sm:$0xff] %v168
    %171 = vst [vmem:[#allocation9 + $0x8] sm:$0xff] %v169
    // Predicated region
    $region34: #{tpu_custom_call.1} parent=1 // pred_check
      _
    $region35: #{tpu_custom_call.1} parent=1 // pred_check_branch
      %173 = sbr.rel (0) target = $region37
    $region36: #{tpu_custom_call.1} parent=1 // pred_region
      %175 = vsyncadd [#allocation5], 0
      %s176 = sshll.u32 [#allocation9], 4
      %s177 = int_to_ptr.vmem [resolvable:$true] %s176
      %s178 = sshll.u32 %s5, 4
      %s179 = int_to_ptr.hbm [resolvable:$true] %s178
      %184 = dma.vmem_to_hbm [thread:$0]  %s177, 256, %s179, [#allocation5], 128, 128, 8
    $region37: #{tpu_custom_call.1} parent=1 // pred_fallthru
      _
    // Predicated region
    $region38: #{tpu_custom_call.1} parent=1 // pred_check
      _
    $region39: #{tpu_custom_call.1} parent=1 // pred_check_branch
      %186 = sbr.rel (0) target = $region41
    $region40: #{tpu_custom_call.1} parent=1 // pred_region
      %188 = dma.done [#allocation5], 256
    $region41: #{tpu_custom_call.1} parent=1 // pred_fallthru
      _
    %189 = vsyncpa [#allocation4], 1
    %190 = vsyncpa [#allocation7], 1
    %191 = vsyncpa [#allocation5], 1

</llo_original>
